<compile_context>
chip_gen: v6e
topology: v6e:2x2x1
jax: 0.10.0
libtpu: 0.0.40
codegen_flags: <defaults>
</compile_context>

<pallas_src>
import functools

import jax
import jax.numpy as jnp
from jax.experimental import pallas as pl
from jax.experimental.pallas import tpu as pltpu


def _round_up(x: int, m: int) -> int:
    return ((x + m - 1) // m) * m


def _fast_rcnn_loss_kernel(logits_ref, labels_ref, pred_ref, gt_ref, out_ref,
                           *, background_class_index: int, num_rows: int):
    tile = logits_ref.shape[0]

    # Row-validity mask: the last tile may extend past the true row count and Pallas
    # delivers unspecified data there, so select away the garbage BEFORE any math.
    row_ids = pl.program_id(0) * tile + jax.lax.broadcasted_iota(
        jnp.int32, (tile, 1), 0)                                          # (T, 1)
    in_bounds = row_ids < num_rows                                        # (T, 1) bool
    validf = in_bounds.astype(jnp.float32)

    labels = jnp.where(in_bounds, labels_ref[...], -1)                    # (T, 1) int32
    logits = jnp.where(in_bounds, logits_ref[...].astype(jnp.float32), 0.0)   # (T, C)
    pred = jnp.where(in_bounds, pred_ref[...].astype(jnp.float32), 0.0)   # (T, 4)
    gt = jnp.where(in_bounds, gt_ref[...].astype(jnp.float32), 0.0)       # (T, 4)

    # --- cross entropy (sum reduction): logsumexp(logits) - logits[label] ---
    m = jnp.max(logits, axis=-1, keepdims=True)                           # (T, 1)
    lse = m + jnp.log(jnp.sum(jnp.exp(logits - m), axis=-1, keepdims=True))
    class_ids = jax.lax.broadcasted_iota(jnp.int32, logits.shape, 1)      # (T, C)
    picked = jnp.sum(jnp.where(class_ids == labels, logits, 0.0),
                     axis=-1, keepdims=True)                              # (T, 1)
    ce_sum = jnp.sum((lse - picked) * validf)                             # ()

    # --- smooth L1 on foreground ROIs (sum reduction) ---
    fg = jnp.logical_and(in_bounds, labels != background_class_index)
    fg = fg.astype(jnp.float32)                                           # (T, 1)
    diff = pred - gt
    absd = jnp.abs(diff)
    sl1 = jnp.where(absd < 1.0, 0.5 * diff * diff, absd - 0.5)            # (T, 4)
    bbox_sum = jnp.sum(sl1 * fg)                                          # ()
    fg_cnt = jnp.sum(fg)                                                  # ()

    # Lane-dense partial-sum slab: lane 0 = CE, lane 1 = smooth-L1, lane 2 = fg count.
    lane = jax.lax.broadcasted_iota(jnp.int32, out_ref.shape, 2)          # (1, 8, 128)
    out_ref[...] = jnp.where(lane == 0, ce_sum,
                             jnp.where(lane == 1, bbox_sum,
                                       jnp.where(lane == 2, fg_cnt, 0.0)))


def _pick_row_tile(m_rows: int, n_classes: int, logits_itemsize: int,
                   bbox_itemsize: int, *, vmem_budget_bytes: int = 8 << 20,
                   max_tile: int = 4096) -> int:
    """Largest row tile (multiple of 16) whose double-buffered inputs fit the budget."""
    bytes_per_row = n_classes * logits_itemsize + 4 + 8 * bbox_itemsize
    tile = vmem_budget_bytes // max(1, 2 * bytes_per_row)   # x2 for double buffering
    tile = max(16, min(max_tile, (tile // 16) * 16))
    tile = min(tile, _round_up(m_rows, 16))                 # never over-size tiny problems
    return max(16, tile)


def fast_rcnn_loss_flat(cls_logits, cls_labels, bbox_pred, bbox_gt,
                        *, background_class_index: int,
                        lambda_fast_rcnn_cls: float,
                        lambda_fast_rcnn_bbox: float):
    """Core entry point: already-concatenated ROI tensors of shape (M,C)/(M,)/(M,4)/(M,4)."""
    m_rows, n_classes = cls_logits.shape
    labels2d = cls_labels.reshape(m_rows, 1).astype(jnp.int32)

    tile = _pick_row_tile(m_rows, n_classes,
                          jnp.dtype(cls_logits.dtype).itemsize,
                          jnp.dtype(bbox_pred.dtype).itemsize)
    num_tiles = pl.cdiv(m_rows, tile)

    kernel = functools.partial(_fast_rcnn_loss_kernel,
                               background_class_index=background_class_index,
                               num_rows=m_rows)

    grid_spec = pltpu.PrefetchScalarGridSpec(
        num_scalar_prefetch=0,
        grid=(num_tiles,),
        in_specs=[
            pl.BlockSpec((tile, n_classes), lambda i: (i, 0)),
            pl.BlockSpec((tile, 1), lambda i: (i, 0)),
            pl.BlockSpec((tile, 4), lambda i: (i, 0)),
            pl.BlockSpec((tile, 4), lambda i: (i, 0)),
        ],
        out_specs=pl.BlockSpec((1, 8, 128), lambda i: (i, 0, 0)),
    )

    partials = pl.pallas_call(
        kernel,
        out_shape=jax.ShapeDtypeStruct((num_tiles, 8, 128), jnp.float32),
        grid_spec=grid_spec,
        compiler_params=pltpu.CompilerParams(
            dimension_semantics=("parallel",)),
    )(cls_logits, labels2d, bbox_pred, bbox_gt)

    totals = jnp.sum(partials[:, 0, :3], axis=0)       # tiny cross-tile reduction
    ce_total, bbox_total, fg_total = totals[0], totals[1], totals[2]

    total_cls_loss = ce_total / (m_rows + 1)            # num_cls_pred + 1
    total_bbox_loss = bbox_total / (fg_total + 1.0)     # num_bbox_pred + 1

    cls_loss = lambda_fast_rcnn_cls * total_cls_loss
    bbox_loss = lambda_fast_rcnn_bbox * total_bbox_loss
    return {
        "fast_rcnn_cls_loss": cls_loss,
        "fast_rcnn_bbox_loss": bbox_loss,
        "fast_rcnn_total_loss": cls_loss + bbox_loss,
    }


def fast_rcnn_loss(cls_logits, cls_labels, bbox_pred, bbox_gt,
                   *, background_class_index: int,
                   lambda_fast_rcnn_cls: float,
                   lambda_fast_rcnn_bbox: float):
    """Convenience wrapper for equal-N stacked inputs of shape (I, N, C)/(I, N)/(I, N, 4)."""
    num_images, n_rois, n_classes = cls_logits.shape
    m_rows = num_images * n_rois
    return fast_rcnn_loss_flat(
        cls_logits.reshape(m_rows, n_classes),
        cls_labels.reshape(m_rows),
        bbox_pred.reshape(m_rows, 4),
        bbox_gt.reshape(m_rows, 4),
        background_class_index=background_class_index,
        lambda_fast_rcnn_cls=lambda_fast_rcnn_cls,
        lambda_fast_rcnn_bbox=lambda_fast_rcnn_bbox,
    )


def fast_rcnn_loss_from_lists(cls_pred_list, bbox_pred_list, cls_label_list, bbox_gt_list,
                              *, background_class_index: int,
                              lambda_fast_rcnn_cls: float,
                              lambda_fast_rcnn_bbox: float):
    """Ragged per-image lists (the PyTorch module's signature): the loss is a set of
    global sums, so host-side concatenation along the ROI axis is exact."""
    # TODO(synk): concatenation happens in XLA on the host program, not in-kernel;
    # truly dynamic (traced-length) ragged lists would need a packed representation.
    return fast_rcnn_loss_flat(
        jnp.concatenate(cls_pred_list, axis=0),
        jnp.concatenate(cls_label_list, axis=0),
        jnp.concatenate(bbox_pred_list, axis=0),
        jnp.concatenate(bbox_gt_list, axis=0),
        background_class_index=background_class_index,
        lambda_fast_rcnn_cls=lambda_fast_rcnn_cls,
        lambda_fast_rcnn_bbox=lambda_fast_rcnn_bbox,
    )


def _reference_loss_lists(cls_pred_list, bbox_pred_list, cls_label_list, bbox_gt_list,
                          *, background_class_index, lambda_cls, lambda_bbox):
    """Pure-JAX reference mirroring the PyTorch forward (per-image list loop)."""
    total_cls, total_bbox, n_fg, n_rows = 0.0, 0.0, 0.0, 0
    for logits, pred, labels, gt in zip(cls_pred_list, bbox_pred_list,
                                        cls_label_list, bbox_gt_list):
        logits = logits.astype(jnp.float32)
        lse = jax.nn.logsumexp(logits, axis=-1)
        picked = jnp.take_along_axis(logits, labels[:, None], axis=-1)[:, 0]
        total_cls = total_cls + jnp.sum(lse - picked)
        fg = (labels != background_class_index).astype(jnp.float32)
        diff = pred.astype(jnp.float32) - gt.astype(jnp.float32)
        absd = jnp.abs(diff)
        sl1 = jnp.where(absd < 1.0, 0.5 * diff * diff, absd - 0.5)
        total_bbox = total_bbox + jnp.sum(sl1 * fg[:, None])
        n_fg = n_fg + jnp.sum(fg)
        n_rows += logits.shape[0]
    total_cls = total_cls / (n_rows + 1)
    total_bbox = total_bbox / (n_fg + 1.0)
    return {
        "fast_rcnn_cls_loss": lambda_cls * total_cls,
        "fast_rcnn_bbox_loss": lambda_bbox * total_bbox,
        "fast_rcnn_total_loss": lambda_cls * total_cls + lambda_bbox * total_bbox,
    }


if __name__ == "__main__":
    key = jax.random.PRNGKey(0)
    k1, k2, k3, k4, k5, k6, k7, k8 = jax.random.split(key, 8)

    num_images, n_rois, n_classes = 2, 8, 8
    background_class_index = 0
    lambda_cls, lambda_bbox = 1.0, 2.0

    # --- stacked equal-N path (f32) ---
    cls_logits = jax.random.normal(k1, (num_images, n_rois, n_classes), jnp.float32)
    cls_labels = jax.random.randint(k2, (num_images, n_rois), 0, n_classes, jnp.int32)
    bbox_pred = jax.random.normal(k3, (num_images, n_rois, 4), jnp.float32)
    bbox_gt = jax.random.normal(k4, (num_images, n_rois, 4), jnp.float32)

    out = fast_rcnn_loss(
        cls_logits, cls_labels, bbox_pred, bbox_gt,
        background_class_index=background_class_index,
        lambda_fast_rcnn_cls=lambda_cls, lambda_fast_rcnn_bbox=lambda_bbox)
    jax.block_until_ready(out)

    ref = _reference_loss_lists(
        [cls_logits[i] for i in range(num_images)],
        [bbox_pred[i] for i in range(num_images)],
        [cls_labels[i] for i in range(num_images)],
        [bbox_gt[i] for i in range(num_images)],
        background_class_index=background_class_index,
        lambda_cls=lambda_cls, lambda_bbox=lambda_bbox)
    for k in out:
        assert jnp.allclose(out[k], ref[k], rtol=1e-5, atol=1e-5), (k, out[k], ref[k])

    # --- bf16 path (native dtype through the DMA, f32 math in-kernel) ---
    out_bf16 = fast_rcnn_loss(
        cls_logits.astype(jnp.bfloat16), cls_labels,
        bbox_pred.astype(jnp.bfloat16), bbox_gt.astype(jnp.bfloat16),
        background_class_index=background_class_index,
        lambda_fast_rcnn_cls=lambda_cls, lambda_fast_rcnn_bbox=lambda_bbox)
    jax.block_until_ready(out_bf16)
    for k in out_bf16:
        assert jnp.allclose(out_bf16[k], ref[k], rtol=3e-2, atol=3e-2), (k, out_bf16[k], ref[k])

    # --- ragged per-image lists (matches the PyTorch module's list signature) ---
    rois_per_image = [5, 11]
    cls_list = [jax.random.normal(k5, (n, n_classes), jnp.float32) for n in rois_per_image]
    lab_list = [jax.random.randint(k6, (n,), 0, n_classes, jnp.int32) for n in rois_per_image]
    prd_list = [jax.random.normal(k7, (n, 4), jnp.float32) for n in rois_per_image]
    gt_list = [jax.random.normal(k8, (n, 4), jnp.float32) for n in rois_per_image]

    out_list = fast_rcnn_loss_from_lists(
        cls_list, prd_list, lab_list, gt_list,
        background_class_index=background_class_index,
        lambda_fast_rcnn_cls=lambda_cls, lambda_fast_rcnn_bbox=lambda_bbox)
    jax.block_until_ready(out_list)
    ref_list = _reference_loss_lists(
        cls_list, prd_list, lab_list, gt_list,
        background_class_index=background_class_index,
        lambda_cls=lambda_cls, lambda_bbox=lambda_bbox)
    for k in out_list:
        assert jnp.allclose(out_list[k], ref_list[k], rtol=1e-5, atol=1e-5), (
            k, out_list[k], ref_list[k])

    print("KERNEL_OK")
</pallas_src>

<mosaic_0001>
module attributes {stable_mosaic.version = 11 : i64} {
  func.func @_fast_rcnn_loss_kernel(%arg0: i32, %arg1: memref<16x8xf32, #tpu.memory_space<vmem>>, %arg2: memref<16x1xi32, #tpu.memory_space<vmem>>, %arg3: memref<16x4xf32, #tpu.memory_space<vmem>>, %arg4: memref<16x4xf32, #tpu.memory_space<vmem>>, %arg5: memref<1x8x128xf32, #tpu.memory_space<vmem>>) attributes {dimension_semantics = [#tpu.dimension_semantics<parallel>], iteration_bounds = array<i64: 1>, scalar_prefetch = 0 : i64, scratch_operands = 0 : i64, tpu.core_type = #tpu.core_type<tc>, window_params = [{transform_indices = @transform_0, window_bounds = array<i64: 16, 8>}, {transform_indices = @transform_1, window_bounds = array<i64: 16, 1>}, {transform_indices = @transform_2, window_bounds = array<i64: 16, 4>}, {transform_indices = @transform_3, window_bounds = array<i64: 16, 4>}, {transform_indices = @transform_4, window_bounds = array<i64: 1, 8, 128>}]} {
    %c16_i32 = arith.constant 16 : i32
    %0 = arith.muli %arg0, %c16_i32 : i32
    %1 = tpu.iota {dimensions = array<i32: 0>} : vector<16x1xi32>
    %2 = vector.broadcast %0 : i32 to vector<16x1xi32>
    %3 = arith.addi %2, %1 : vector<16x1xi32>
    %c16_i32_0 = arith.constant 16 : i32
    %4 = vector.broadcast %c16_i32_0 : i32 to vector<16x1xi32>
    %5 = arith.cmpi slt, %3, %4 : vector<16x1xi32>
    %6 = arith.extui %5 : vector<16x1xi1> to vector<16x1xi32>
    %7 = arith.sitofp %6 : vector<16x1xi32> to vector<16x1xf32>
    %c0 = arith.constant 0 : index
    %c0_1 = arith.constant 0 : index
    %8 = vector.load %arg2[%c0, %c0_1] : memref<16x1xi32, #tpu.memory_space<vmem>>, vector<16x1xi32>
    %c-1_i32 = arith.constant -1 : i32
    %9 = vector.broadcast %c-1_i32 : i32 to vector<16x1xi32>
    %10 = arith.select %5, %8, %9 : vector<16x1xi1>, vector<16x1xi32>
    %c0_2 = arith.constant 0 : index
    %c0_3 = arith.constant 0 : index
    %11 = vector.load %arg1[%c0_2, %c0_3] : memref<16x8xf32, #tpu.memory_space<vmem>>, vector<16x8xf32>
    %cst = arith.constant 0.000000e+00 : f32
    %12 = vector.shape_cast %5 : vector<16x1xi1> to vector<16x1xi1>
    %13 = vector.broadcast %12 : vector<16x1xi1> to vector<16x8xi1>
    %14 = vector.broadcast %cst : f32 to vector<16x8xf32>
    %15 = arith.select %13, %11, %14 : vector<16x8xi1>, vector<16x8xf32>
    %c0_4 = arith.constant 0 : index
    %c0_5 = arith.constant 0 : index
    %16 = vector.load %arg3[%c0_4, %c0_5] : memref<16x4xf32, #tpu.memory_space<vmem>>, vector<16x4xf32>
    %cst_6 = arith.constant 0.000000e+00 : f32
    %17 = vector.shape_cast %5 : vector<16x1xi1> to vector<16x1xi1>
    %18 = vector.broadcast %17 : vector<16x1xi1> to vector<16x4xi1>
    %19 = vector.broadcast %cst_6 : f32 to vector<16x4xf32>
    %20 = arith.select %18, %16, %19 : vector<16x4xi1>, vector<16x4xf32>
    %c0_7 = arith.constant 0 : index
    %c0_8 = arith.constant 0 : index
    %21 = vector.load %arg4[%c0_7, %c0_8] : memref<16x4xf32, #tpu.memory_space<vmem>>, vector<16x4xf32>
    %cst_9 = arith.constant 0.000000e+00 : f32
    %22 = vector.shape_cast %5 : vector<16x1xi1> to vector<16x1xi1>
    %23 = vector.broadcast %22 : vector<16x1xi1> to vector<16x4xi1>
    %24 = vector.broadcast %cst_9 : f32 to vector<16x4xf32>
    %25 = arith.select %23, %21, %24 : vector<16x4xi1>, vector<16x4xf32>
    %cst_10 = arith.constant dense<0xFF800000> : vector<16xf32>
    %26 = vector.multi_reduction <maximumf>, %15, %cst_10 [1] : vector<16x8xf32> to vector<16xf32>
    %27 = vector.shape_cast %26 : vector<16xf32> to vector<16x1xf32>
    %28 = vector.broadcast %27 : vector<16x1xf32> to vector<16x8xf32>
    %29 = arith.subf %15, %28 : vector<16x8xf32>
    %30 = math.exp %29 : vector<16x8xf32>
    %cst_11 = arith.constant dense<0.000000e+00> : vector<16xf32>
    %31 = vector.multi_reduction <add>, %30, %cst_11 [1] : vector<16x8xf32> to vector<16xf32>
    %32 = vector.shape_cast %31 : vector<16xf32> to vector<16x1xf32>
    %33 = math.log %32 : vector<16x1xf32>
    %34 = arith.addf %27, %33 : vector<16x1xf32>
    %35 = tpu.iota {dimensions = array<i32: 1>} : vector<16x8xi32>
    %36 = vector.broadcast %10 : vector<16x1xi32> to vector<16x8xi32>
    %37 = arith.cmpi eq, %35, %36 : vector<16x8xi32>
    %cst_12 = arith.constant 0.000000e+00 : f32
    %38 = vector.broadcast %cst_12 : f32 to vector<16x8xf32>
    %39 = arith.select %37, %15, %38 : vector<16x8xi1>, vector<16x8xf32>
    %cst_13 = arith.constant dense<0.000000e+00> : vector<16xf32>
    %40 = vector.multi_reduction <add>, %39, %cst_13 [1] : vector<16x8xf32> to vector<16xf32>
    %41 = vector.shape_cast %40 : vector<16xf32> to vector<16x1xf32>
    %42 = arith.subf %34, %41 : vector<16x1xf32>
    %43 = arith.mulf %42, %7 : vector<16x1xf32>
    %44 = vector.shape_cast %43 : vector<16x1xf32> to vector<1x16x1xf32>
    %cst_14 = arith.constant dense<0.000000e+00> : vector<1xf32>
    %45 = vector.multi_reduction <add>, %44, %cst_14 [1, 2] : vector<1x16x1xf32> to vector<1xf32>
    %46 = vector.shape_cast %45 : vector<1xf32> to vector<1x1x1xf32>
    %47 = vector.extract %46[0, 0, 0] : f32 from vector<1x1x1xf32>
    %c0_i32 = arith.constant 0 : i32
    %48 = vector.broadcast %c0_i32 : i32 to vector<16x1xi32>
    %49 = arith.cmpi ne, %10, %48 : vector<16x1xi32>
    %50 = arith.andi %5, %49 : vector<16x1xi1>
    %51 = arith.extui %50 : vector<16x1xi1> to vector<16x1xi32>
    %52 = arith.sitofp %51 : vector<16x1xi32> to vector<16x1xf32>
    %53 = arith.subf %20, %25 : vector<16x4xf32>
    %54 = math.absf %53 : vector<16x4xf32>
    %cst_15 = arith.constant 1.000000e+00 : f32
    %55 = vector.broadcast %cst_15 : f32 to vector<16x4xf32>
    %56 = arith.cmpf olt, %54, %55 : vector<16x4xf32>
    %cst_16 = arith.constant 5.000000e-01 : f32
    %57 = vector.broadcast %cst_16 : f32 to vector<16x4xf32>
    %58 = arith.mulf %57, %53 : vector<16x4xf32>
    %59 = arith.mulf %58, %53 : vector<16x4xf32>
    %cst_17 = arith.constant 5.000000e-01 : f32
    %60 = vector.broadcast %cst_17 : f32 to vector<16x4xf32>
    %61 = arith.subf %54, %60 : vector<16x4xf32>
    %62 = arith.select %56, %59, %61 : vector<16x4xi1>, vector<16x4xf32>
    %63 = vector.broadcast %52 : vector<16x1xf32> to vector<16x4xf32>
    %64 = arith.mulf %62, %63 : vector<16x4xf32>
    %65 = vector.shape_cast %64 : vector<16x4xf32> to vector<1x16x4xf32>
    %cst_18 = arith.constant dense<0.000000e+00> : vector<1xf32>
    %66 = vector.multi_reduction <add>, %65, %cst_18 [1, 2] : vector<1x16x4xf32> to vector<1xf32>
    %67 = vector.shape_cast %66 : vector<1xf32> to vector<1x1x1xf32>
    %68 = vector.extract %67[0, 0, 0] : f32 from vector<1x1x1xf32>
    %69 = vector.shape_cast %52 : vector<16x1xf32> to vector<1x16x1xf32>
    %cst_19 = arith.constant dense<0.000000e+00> : vector<1xf32>
    %70 = vector.multi_reduction <add>, %69, %cst_19 [1, 2] : vector<1x16x1xf32> to vector<1xf32>
    %71 = vector.shape_cast %70 : vector<1xf32> to vector<1x1x1xf32>
    %72 = vector.extract %71[0, 0, 0] : f32 from vector<1x1x1xf32>
    %73 = tpu.iota {dimensions = array<i32: 2>} : vector<1x8x128xi32>
    %c0_i32_20 = arith.constant 0 : i32
    %74 = vector.broadcast %c0_i32_20 : i32 to vector<1x8x128xi32>
    %75 = arith.cmpi eq, %73, %74 : vector<1x8x128xi32>
    %c1_i32 = arith.constant 1 : i32
    %76 = vector.broadcast %c1_i32 : i32 to vector<1x8x128xi32>
    %77 = arith.cmpi eq, %73, %76 : vector<1x8x128xi32>
    %c2_i32 = arith.constant 2 : i32
    %78 = vector.broadcast %c2_i32 : i32 to vector<1x8x128xi32>
    %79 = arith.cmpi eq, %73, %78 : vector<1x8x128xi32>
    %cst_21 = arith.constant 0.000000e+00 : f32
    %80 = vector.broadcast %72 : f32 to vector<1x8x128xf32>
    %81 = vector.broadcast %cst_21 : f32 to vector<1x8x128xf32>
    %82 = arith.select %79, %80, %81 : vector<1x8x128xi1>, vector<1x8x128xf32>
    %83 = vector.broadcast %68 : f32 to vector<1x8x128xf32>
    %84 = arith.select %77, %83, %82 : vector<1x8x128xi1>, vector<1x8x128xf32>
    %85 = vector.broadcast %47 : f32 to vector<1x8x128xf32>
    %86 = arith.select %75, %85, %84 : vector<1x8x128xi1>, vector<1x8x128xf32>
    %c0_22 = arith.constant 0 : index
    %c0_23 = arith.constant 0 : index
    %c0_24 = arith.constant 0 : index
    %87 = vector.load %arg5[%c0_22, %c0_23, %c0_24] : memref<1x8x128xf32, #tpu.memory_space<vmem>>, vector<1x8x128xf32>
    tpu.vector_store %arg5[%c0_22, %c0_23, %c0_24], %86 {strides = array<i32>} : memref<1x8x128xf32, #tpu.memory_space<vmem>>, vector<1x8x128xf32>,
    return
  }
  func.func @transform_0(%arg0: i32) -> (i32, i32) {
    %c0_i32 = arith.constant 0 : i32
    %c0_i32_0 = arith.constant 0 : i32
    return %arg0, %c0_i32 : i32, i32
  }
  func.func @transform_1(%arg0: i32) -> (i32, i32) {
    %c0_i32 = arith.constant 0 : i32
    %c0_i32_0 = arith.constant 0 : i32
    return %arg0, %c0_i32 : i32, i32
  }
  func.func @transform_2(%arg0: i32) -> (i32, i32) {
    %c0_i32 = arith.constant 0 : i32
    %c0_i32_0 = arith.constant 0 : i32
    return %arg0, %c0_i32 : i32, i32
  }
  func.func @transform_3(%arg0: i32) -> (i32, i32) {
    %c0_i32 = arith.constant 0 : i32
    %c0_i32_0 = arith.constant 0 : i32
    return %arg0, %c0_i32 : i32, i32
  }
  func.func @transform_4(%arg0: i32) -> (i32, i32, i32) {
    %c0_i32 = arith.constant 0 : i32
    %c0_i32_0 = arith.constant 0 : i32
    %c0_i32_1 = arith.constant 0 : i32
    return %arg0, %c0_i32, %c0_i32_0 : i32, i32, i32
  }
}

</mosaic_0001>

<llo_original>
// kernel: tpu_custom_call.1
$region0: #{tpu_custom_call.1}
  #allocation0 [shape = 'u32[]', space=smem, size = 0x4, offset = 0x4, fixed_abs, tag = 'smem constant byte address 0x4 - core index']
  #allocation1 [shape = 'u32[144,128]{1,0:T(1,128)}', space=vmem, size = 0x12000, scoped, tag = 'internal scratch']
  %s0 = inlined_call_operand.vmem [shape: f32[16,8], index: 0, kind: input, shape index: {}]
  %s1 = inlined_call_operand.vmem [shape: s32[16,1], index: 1, kind: input, shape index: {}]
  %s2 = inlined_call_operand.vmem [shape: f32[16,4], index: 2, kind: input, shape index: {}]
  %s3 = inlined_call_operand.vmem [shape: f32[16,4], index: 3, kind: input, shape index: {}]
  %s4 = inlined_call_operand.hbm [shape: f32[1,8,128], index: 4, kind: output, shape index: {}]
  %s5 = sld [smem:[#allocation0]]
  $region26: #{tpu_custom_call.1} parent=0
    _
  %s7 = ssub.s32 1, %s5
  %s8 = scalar_select 0, %s7, %s5
  $region1: #{tpu_custom_call.1} parent=0
    #allocation2 [shape = 'u8[4096]{0}', space=vmem, size = 0x1000, scoped, tag = 'output window, operand 0, single buffered']
    #allocation3 [shape = 's32[1]{0}', space=sflag, size = 0x4, scoped, tag = 'scoped memory for tpu_custom_call.1']
    %9 = vsyncpa [#allocation3], 0
    // Predicated region
    $region2: #{tpu_custom_call.1} parent=1 // pred_check
      _
    $region3: #{tpu_custom_call.1} parent=1 // pred_check_branch
      %11 = sbr.rel (0) target = $region5
    $region4: #{tpu_custom_call.1} parent=1 // pred_region
      _
    $region5: #{tpu_custom_call.1} parent=1 // pred_fallthru
      _
    // Predicated region
    $region6: #{tpu_custom_call.1} parent=1 // pred_check
      _
    $region7: #{tpu_custom_call.1} parent=1 // pred_check_branch
      %13 = sbr.rel (0) target = $region9
    $region8: #{tpu_custom_call.1} parent=1 // pred_region
      _
    $region9: #{tpu_custom_call.1} parent=1 // pred_fallthru
      _
    // Predicated region
    $region10: #{tpu_custom_call.1} parent=1 // pred_check
      _
    $region11: #{tpu_custom_call.1} parent=1 // pred_check_branch
      %15 = sbr.rel (0) target = $region13
    $region12: #{tpu_custom_call.1} parent=1 // pred_region
      _
    $region13: #{tpu_custom_call.1} parent=1 // pred_fallthru
      _
    // Predicated region
    $region14: #{tpu_custom_call.1} parent=1 // pred_check
      _
    $region15: #{tpu_custom_call.1} parent=1 // pred_check_branch
      %17 = sbr.rel (0) target = $region17
    $region16: #{tpu_custom_call.1} parent=1 // pred_region
      _
    $region17: #{tpu_custom_call.1} parent=1 // pred_fallthru
      _
    %s18 = smul.u32 0, 16
    %v19 = vlaneseq
    %v20 = vshrl.u32 %v19, 7
    %v21 = vadd.s32 %v20, 8
    %v22 = vstv %s18
    %v23 = vadd.s32 %v22, %v20
    %v24 = vadd.s32 %v22, %v21
    %vm25 = vcmp.lt.s32.totalorder %v23, 16
    %vm26 = vcmp.lt.s32.totalorder %v24, 16
    %v27 = vsel %vm25, 1, 0
    %v28 = vsel %vm26, 1, 0
    %v29 = vcvt.s32.f32 %v27
    %v30 = vcvt.s32.f32 %v28
    %v31 = vld [vmem:[%s1] sm:$0xff]
    %v32 = vld [vmem:[%s1 + $0x8] sm:$0xff]
    %v33 = vsel %vm25, %v31, 4294967295
    %v34 = vsel %vm26, %v32, 4294967295
    %v35 = vld [vmem:[%s0] sm:$0xff]
    %v36 = vld [vmem:[%s0 + $0x8] sm:$0xff]
    %vm37 = vcmp.eq.s32.totalorder %v27, 1
    %vm38 = vcmp.eq.s32.totalorder %v28, 1
    %v39 = vsel %vm37, %v35, 0.0
    %v40 = vsel %vm38, %v36, 0.0
    %v41 = vld [vmem:[%s2] sm:$0xff]
    %v42 = vld [vmem:[%s2 + $0x8] sm:$0xff]
    %v43 = vsel %vm37, %v41, 0.0
    %v44 = vsel %vm38, %v42, 0.0
    %v45 = vld [vmem:[%s3] sm:$0xff]
    %v46 = vld [vmem:[%s3 + $0x8] sm:$0xff]
    %v47 = vsel %vm37, %v45, 0.0
    %v48 = vsel %vm38, %v46, 0.0
    %vm49 = vcmask 64512
    %v50 = vsel %vm49, %v39, -inf
    %51 = vmax.xlane.f32.xlu0 %v50
    %v52 = vpop.xlane.xlu0 %51
    %v53 = vsel %vm49, %v40, -inf
    %54 = vmax.xlane.f32.xlu0 %v53
    %v55 = vpop.xlane.xlu0 %54
    %v56 = vsub.f32 %v39, %v52
    %v57 = vsub.f32 %v40, %v55
    %v58 = vmul.f32 %v56, 1.442695
    %v59 = vpow.pop %v58
    %v60 = vmul.f32 %v57, 1.442695
    %v61 = vpow.pop %v60
    %v62 = vsel %vm49, %v59, 0.0
    %63 = vadd.xlane.f32.xlu0 %v62
    %v64 = vpop.xlane.xlu0 %63
    %v65 = vsel %vm49, %v61, 0.0
    %66 = vadd.xlane.f32.xlu0 %v65
    %v67 = vpop.xlane.xlu0 %66
    %v68 = vlog2.pop %v64
    %v69 = vmul.f32 %v68, 0.6931472
    %v70 = vlog2.pop %v67
    %v71 = vmul.f32 %v70, 0.6931472
    %v72 = vadd.f32 %v52, %v69
    %v73 = vadd.f32 %v55, %v71
    %v74 = vlaneseq
    %v75 = vand.u32 %v74, 127
    %76 = vset.pattern.permute.xlu0 0
    %77 = vperm.xlu0 %76, %v33
    %v78 = vpop.permute.xlu0 %77
    %79 = vset.pattern.permute.xlu0 0
    %80 = vperm.xlu0 %79, %v34
    %v81 = vpop.permute.xlu0 %80
    %vm82 = vcmp.eq.s32.totalorder %v75, %v78
    %vm83 = vcmp.eq.s32.totalorder %v75, %v81
    %v84 = vsel %vm82, %v39, 0.0
    %v85 = vsel %vm83, %v40, 0.0
    %v86 = vsel %vm49, %v84, 0.0
    %87 = vadd.xlane.f32.xlu0 %v86
    %v88 = vpop.xlane.xlu0 %87
    %v89 = vsel %vm49, %v85, 0.0
    %90 = vadd.xlane.f32.xlu0 %v89
    %v91 = vpop.xlane.xlu0 %90
    %v92 = vsub.f32 %v72, %v88
    %v93 = vsub.f32 %v73, %v91
    %v94 = vmul.f32 %v92, %v29
    %v95 = vmul.f32 %v93, %v30
    %vm96 = vcmask 7168
    %v97 = vsel %vm96, %v94, 0.0
    %v98 = vsel %vm96, %v95, 0.0
    %v99 = vadd.f32 %v97, %v98
    %100 = vadd.xlane.f32.xlu0 %v99
    %v101 = vpop.xlane.xlu0 %100
    %v102 = vrot.slane %v101, 4
    %v103 = vadd.f32 %v101, %v102
    %v104 = vrot.slane %v103, 2
    %v105 = vadd.f32 %v103, %v104
    %v106 = vrot.slane %v105, 1
    %v107 = vadd.f32 %v105, %v106
    %s108 = vtos %v107
    %vm109 = vcmp.ne.s32.totalorder %v33, 0
    %vm110 = vcmp.ne.s32.totalorder %v34, 0
    %vm111 = vmand %vm25, %vm109
    %vm112 = vmand %vm26, %vm110
    %v113 = vsel %vm111, 1, 0
    %v114 = vsel %vm112, 1, 0
    %v115 = vcvt.s32.f32 %v113
    %v116 = vcvt.s32.f32 %v114
    %v117 = vsub.f32 %v43, %v47
    %v118 = vsub.f32 %v44, %v48
    %v119 = vand.u32 2147483647, %v117
    %v120 = vand.u32 2147483647, %v118
    %vm121 = vcmp.lt.f32.partialorder %v119, 1.0
    %vm122 = vcmp.lt.f32.partialorder %v120, 1.0
    %v123 = vmul.f32 %v117, 0.5
    %v124 = vmul.f32 %v118, 0.5
    %v125 = vmul.f32 %v123, %v117
    %v126 = vmul.f32 %v124, %v118
    %v127 = vsub.f32 %v119, 0.5
    %v128 = vsub.f32 %v120, 0.5
    %v129 = vsel %vm121, %v125, %v127
    %v130 = vsel %vm122, %v126, %v128
    %132 = vset.pattern.permute.xlu0 0
    %133 = vperm.xlu0 %132, %v115
    %v134 = vpop.permute.xlu0 %133
    %137 = vset.pattern.permute.xlu0 0
    %138 = vperm.xlu0 %137, %v116
    %v139 = vpop.permute.xlu0 %138
    %v141 = vmul.f32 %v129, %v134
    %v142 = vmul.f32 %v130, %v139
    %vm143 = vcmask 31744
    %v144 = vsel %vm143, %v141, 0.0
    %v145 = vsel %vm143, %v142, 0.0
    %v146 = vadd.f32 %v144, %v145
    %147 = vadd.xlane.f32.xlu0 %v146
    %v148 = vpop.xlane.xlu0 %147
    %v149 = vrot.slane %v148, 4
    %v150 = vadd.f32 %v148, %v149
    %v151 = vrot.slane %v150, 2
    %v152 = vadd.f32 %v150, %v151
    %v153 = vrot.slane %v152, 1
    %v154 = vadd.f32 %v152, %v153
    %s155 = vtos %v154
    %v156 = vsel %vm96, %v115, 0.0
    %v157 = vsel %vm96, %v116, 0.0
    %v158 = vadd.f32 %v156, %v157
    %159 = vadd.xlane.f32.xlu0 %v158
    %v160 = vpop.xlane.xlu0 %159
    %v161 = vrot.slane %v160, 4
    %v162 = vadd.f32 %v160, %v161
    %v163 = vrot.slane %v162, 2
    %v164 = vadd.f32 %v162, %v163
    %v165 = vrot.slane %v164, 1
    %v166 = vadd.f32 %v164, %v165
    %s167 = vtos %v166
    %vm168 = vcmp.eq.s32.totalorder %v75, 0
    %vm169 = vcmp.eq.s32.totalorder %v75, 1
    %vm170 = vcmp.eq.s32.totalorder %v75, 2
    %v171 = vstv %s167
    %v172 = vsel %vm170, %v171, 0.0
    %v173 = vstv %s155
    %v174 = vsel %vm169, %v173, %v172
    %v175 = vstv %s108
    %v176 = vsel %vm168, %v175, %v174
    %177 = vst [vmem:[#allocation2] sm:$0xff] %v176
    // Predicated region
    $region18: #{tpu_custom_call.1} parent=1 // pred_check
      _
    $region19: #{tpu_custom_call.1} parent=1 // pred_check_branch
      %179 = sbr.rel (0) target = $region21
    $region20: #{tpu_custom_call.1} parent=1 // pred_region
      %s181 = ssub.s32 128, 128
      %182 = vsyncadd [#allocation3], %s181
      %s184 = sshll.u32 [#allocation2], 4
      %s185 = int_to_ptr.vmem [resolvable:$true] %s184
      %187 = dma.vmem_to_hbm [thread:$0]  %s185, 128, %s4, [#allocation3]
    $region21: #{tpu_custom_call.1} parent=1 // pred_fallthru
      _
    // Predicated region
    $region22: #{tpu_custom_call.1} parent=1 // pred_check
      _
    $region23: #{tpu_custom_call.1} parent=1 // pred_check_branch
      %189 = sbr.rel (0) target = $region25
    $region24: #{tpu_custom_call.1} parent=1 // pred_region
      %190 = dma.done [#allocation3], 128
    $region25: #{tpu_custom_call.1} parent=1 // pred_fallthru
      _
    %191 = vsyncpa [#allocation3], 1

</llo_original>
